<compile_context>
chip_gen: v7x
topology: tpu7x:2x2x1
jax: 0.10.0
libtpu: 0.0.40
codegen_flags: <defaults>
</compile_context>

<pallas_src>
import jax
import jax.numpy as jnp
from jax.experimental import pallas as pl
from jax.experimental.pallas import tpu as pltpu


def _round_up(n, m):
    return (n + m - 1) // m * m


def _mlp_kernel(x_ref, w1_ref, w2_ref, w3_ref, w4_ref, b_ref, o_ref):
    h1 = w1_ref.shape[1]
    h2 = w2_ref.shape[1]
    h3 = w3_ref.shape[1]

    b = b_ref[...]                       # (4, BPAD) packed biases, VMEM-resident

    # fc1 + ReLU
    h = jnp.dot(x_ref[...], w1_ref[...], preferred_element_type=jnp.float32)
    h = jnp.maximum(h + b[0:1, :h1], 0.0)
    # fc2 + ReLU
    h = jnp.dot(h, w2_ref[...], preferred_element_type=jnp.float32)
    h = jnp.maximum(h + b[1:2, :h2], 0.0)
    # fc3 + ReLU
    h = jnp.dot(h, w3_ref[...], preferred_element_type=jnp.float32)
    h = jnp.maximum(h + b[2:3, :h3], 0.0)
    # Dropout(p=0.5) -> identity in eval/inference mode.
    # TODO(synk): training-mode dropout (scaled Bernoulli mask via
    # pltpu.prng_seed / pltpu.prng_random_bits) not implemented.

    # fc4 (out_features == 1): VPU multiply + XLU lane reduce -> (tb, 1) logits.
    logits = jnp.sum(h * w4_ref[...], axis=-1, keepdims=True) + b[3:4, 0:1]
    # sigmoid(z) = 0.5 * (1 + tanh(z / 2))  -- one EUP op, numerically stable.
    o_ref[...] = (0.5 * jnp.tanh(0.5 * logits) + 0.5).astype(o_ref.dtype)


def prepare_params(params):
    """One-time parameter prep, hoisted out of the per-call forward path."""
    w1, b1 = params["fc1"]
    w2, b2 = params["fc2"]
    w3, b3 = params["fc3"]
    w4, b4 = params["fc4"]

    h1, h2, h3 = w1.shape[1], w2.shape[1], w3.shape[1]

    # Pack all four biases into a single (4, BPAD) block: one DMA, one VMEM window.
    bpad = _round_up(max(h1, h2, h3, 128), 128)
    bias_pack = jnp.zeros((4, bpad), jnp.float32)
    bias_pack = bias_pack.at[0, :h1].set(b1.reshape(-1))
    bias_pack = bias_pack.at[1, :h2].set(b2.reshape(-1))
    bias_pack = bias_pack.at[2, :h3].set(b3.reshape(-1))
    bias_pack = bias_pack.at[3, :1].set(b4.reshape(-1))

    return {
        "w1": w1.astype(jnp.float32),
        "w2": w2.astype(jnp.float32),
        "w3": w3.astype(jnp.float32),
        "w4_row": w4.reshape(1, h3).astype(jnp.float32),   # (1, h3) row for VPU fc4
        "bias_pack": bias_pack,
    }


def neural_network_forward(x, prepared, *, block_b=4096, min_batch_steps=2):
    """x: (B, in_ch) float32. prepared: output of prepare_params()."""
    w1 = prepared["w1"]
    w2 = prepared["w2"]
    w3 = prepared["w3"]
    w4_row = prepared["w4_row"]
    bias_pack = prepared["bias_pack"]

    B, in_ch = x.shape
    h1, h2, h3 = w1.shape[1], w2.shape[1], w3.shape[1]
    bpad = bias_pack.shape[1]

    # Batch tiling: sublane-aligned (multiple of 8 rows), capped at block_b,
    # and split into >= min_batch_steps grid steps so both v7x TensorCores get
    # work (neutral on single-TC v5e/v6e). Last tile may be ragged; Pallas
    # clips the boundary DMAs so no host-side jnp.pad copy of x is needed.
    tb = min(block_b, _round_up(pl.cdiv(B, min_batch_steps), 8))
    tb = max(tb, 8)
    grid = (pl.cdiv(B, tb),)

    flops = 2 * B * (in_ch * h1 + h1 * h2 + h2 * h3 + h3 * 1)
    bytes_accessed = 4 * (x.size + w1.size + w2.size + w3.size + w4_row.size
                          + bias_pack.size + B * 1)
    cost = pl.CostEstimate(flops=flops, transcendentals=B,
                           bytes_accessed=bytes_accessed)

    out = pl.pallas_call(
        _mlp_kernel,
        out_shape=jax.ShapeDtypeStruct((B, 1), jnp.float32),
        grid_spec=pltpu.PrefetchScalarGridSpec(
            num_scalar_prefetch=0,
            grid=grid,
            in_specs=[
                pl.BlockSpec((tb, in_ch), lambda i: (i, 0)),   # x: tiled over batch
                pl.BlockSpec((in_ch, h1), lambda i: (0, 0)),   # weights: VMEM-resident
                pl.BlockSpec((h1, h2), lambda i: (0, 0)),
                pl.BlockSpec((h2, h3), lambda i: (0, 0)),
                pl.BlockSpec((1, h3), lambda i: (0, 0)),       # fc4 weight row
                pl.BlockSpec((4, bpad), lambda i: (0, 0)),     # packed biases
            ],
            out_specs=pl.BlockSpec((tb, 1), lambda i: (i, 0)), # narrow output, no padding
        ),
        compiler_params=pltpu.CompilerParams(
            dimension_semantics=("parallel",),    # batch axis shardable across TCs (v7x)
            vmem_limit_bytes=32 * 1024 * 1024,
        ),
        cost_estimate=cost,
    )(x, w1, w2, w3, w4_row, bias_pack)

    return out


def init_params(key, in_ch, n_hidden):
    """Deterministic Linear-layer init (uniform, like torch's default range)."""
    dims = [(in_ch, n_hidden),
            (n_hidden, n_hidden * 2),
            (n_hidden * 2, n_hidden),
            (n_hidden, 1)]
    names = ["fc1", "fc2", "fc3", "fc4"]
    params = {}
    for name, (fan_in, fan_out) in zip(names, dims):
        key, kw, kb = jax.random.split(key, 3)
        bound = 1.0 / jnp.sqrt(fan_in)
        # weight stored as (fan_in, fan_out) == PyTorch weight.T
        w = jax.random.uniform(kw, (fan_in, fan_out), jnp.float32, -bound, bound)
        b = jax.random.uniform(kb, (1, fan_out), jnp.float32, -bound, bound)
        params[name] = (w, b)
    return params


if __name__ == "__main__":
    key = jax.random.PRNGKey(0)
    in_ch, n_hidden, batch = 16, 32, 200   # batch not a multiple of the tile -> ragged path

    key, kx = jax.random.split(key)
    x = jax.random.normal(kx, (batch, in_ch), jnp.float32)
    params = init_params(key, in_ch, n_hidden)
    prepared = prepare_params(params)       # one-time packing, outside the forward path

    # block_b=128 -> 2 grid steps (104-row tiles): exercises the "parallel" batch
    # axis, VMEM-resident weights, and a clipped boundary tile (200 = 104 + 96 rows).
    out = neural_network_forward(x, prepared, block_b=128)
    jax.block_until_ready(out)

    # Pure-JAX reference (eval-mode forward).
    def ref_forward(xx, p):
        hp = jax.lax.Precision.HIGHEST
        h = jnp.maximum(jnp.dot(xx, p["fc1"][0], precision=hp) + p["fc1"][1], 0.0)
        h = jnp.maximum(jnp.dot(h, p["fc2"][0], precision=hp) + p["fc2"][1], 0.0)
        h = jnp.maximum(jnp.dot(h, p["fc3"][0], precision=hp) + p["fc3"][1], 0.0)
        return jax.nn.sigmoid(jnp.dot(h, p["fc4"][0], precision=hp) + p["fc4"][1])

    ref = ref_forward(x, params)

    assert out.shape == (batch, 1)
    assert bool(jnp.allclose(out, ref, atol=1e-3, rtol=1e-3))
    assert bool(jnp.all((out > 0.0) & (out < 1.0)))
    print("KERNEL_OK")
</pallas_src>

<mosaic_0001>
module attributes {stable_mosaic.version = 11 : i64} {
  func.func @_mlp_kernel(%arg0: i32, %arg1: memref<104x16xf32, #tpu.memory_space<vmem>>, %arg2: memref<16x32xf32, #tpu.memory_space<vmem>>, %arg3: memref<32x64xf32, #tpu.memory_space<vmem>>, %arg4: memref<64x32xf32, #tpu.memory_space<vmem>>, %arg5: memref<1x32xf32, #tpu.memory_space<vmem>>, %arg6: memref<4x128xf32, #tpu.memory_space<vmem>>, %arg7: memref<104x1xf32, #tpu.memory_space<vmem>>) attributes {dimension_semantics = [#tpu.dimension_semantics<parallel>], iteration_bounds = array<i64: 2>, scalar_prefetch = 0 : i64, scratch_operands = 0 : i64, tpu.core_type = #tpu.core_type<tc>, window_params = [{transform_indices = @transform_0, window_bounds = array<i64: 104, 16>}, {pipeline_mode = #tpu.pipeline_mode<synchronous>, transform_indices = @transform_1, window_bounds = array<i64: 16, 32>}, {pipeline_mode = #tpu.pipeline_mode<synchronous>, transform_indices = @transform_2, window_bounds = array<i64: 32, 64>}, {pipeline_mode = #tpu.pipeline_mode<synchronous>, transform_indices = @transform_3, window_bounds = array<i64: 64, 32>}, {pipeline_mode = #tpu.pipeline_mode<synchronous>, transform_indices = @transform_4, window_bounds = array<i64: 1, 32>}, {pipeline_mode = #tpu.pipeline_mode<synchronous>, transform_indices = @transform_5, window_bounds = array<i64: 4, 128>}, {transform_indices = @transform_6, window_bounds = array<i64: 104, 1>}]} {
    %c0 = arith.constant 0 : index
    %c0_0 = arith.constant 0 : index
    %0 = vector.load %arg6[%c0, %c0_0] : memref<4x128xf32, #tpu.memory_space<vmem>>, vector<4x128xf32>
    %c0_1 = arith.constant 0 : index
    %c0_2 = arith.constant 0 : index
    %1 = vector.load %arg1[%c0_1, %c0_2] : memref<104x16xf32, #tpu.memory_space<vmem>>, vector<104x16xf32>
    %c0_3 = arith.constant 0 : index
    %c0_4 = arith.constant 0 : index
    %2 = vector.load %arg2[%c0_3, %c0_4] : memref<16x32xf32, #tpu.memory_space<vmem>>, vector<16x32xf32>
    %cst = arith.constant dense<0.000000e+00> : vector<104x32xf32>
    %3 = tpu.matmul %1, %2, %cst {dimension_numbers = #tpu.dot_dimension_numbers<[1], [0], [0], [1], [0, 0, 1, 1], [], []>} : vector<104x16xf32>, vector<16x32xf32>, vector<104x32xf32> -> vector<104x32xf32>
    %4 = vector.extract_strided_slice %0 {offsets = [0, 0], sizes = [1, 32], strides = [1, 1]} : vector<4x128xf32> to vector<1x32xf32>
    %5 = vector.broadcast %4 : vector<1x32xf32> to vector<104x32xf32>
    %6 = arith.addf %3, %5 : vector<104x32xf32>
    %cst_5 = arith.constant 0.000000e+00 : f32
    %7 = vector.broadcast %cst_5 : f32 to vector<104x32xf32>
    %8 = arith.maximumf %6, %7 : vector<104x32xf32>
    %c0_6 = arith.constant 0 : index
    %c0_7 = arith.constant 0 : index
    %9 = vector.load %arg3[%c0_6, %c0_7] : memref<32x64xf32, #tpu.memory_space<vmem>>, vector<32x64xf32>
    %cst_8 = arith.constant dense<0.000000e+00> : vector<104x64xf32>
    %10 = tpu.matmul %8, %9, %cst_8 {dimension_numbers = #tpu.dot_dimension_numbers<[1], [0], [0], [1], [0, 0, 1, 1], [], []>} : vector<104x32xf32>, vector<32x64xf32>, vector<104x64xf32> -> vector<104x64xf32>
    %11 = vector.extract_strided_slice %0 {offsets = [1, 0], sizes = [1, 64], strides = [1, 1]} : vector<4x128xf32> to vector<1x64xf32>
    %12 = vector.broadcast %11 : vector<1x64xf32> to vector<104x64xf32>
    %13 = arith.addf %10, %12 : vector<104x64xf32>
    %cst_9 = arith.constant 0.000000e+00 : f32
    %14 = vector.broadcast %cst_9 : f32 to vector<104x64xf32>
    %15 = arith.maximumf %13, %14 : vector<104x64xf32>
    %c0_10 = arith.constant 0 : index
    %c0_11 = arith.constant 0 : index
    %16 = vector.load %arg4[%c0_10, %c0_11] : memref<64x32xf32, #tpu.memory_space<vmem>>, vector<64x32xf32>
    %cst_12 = arith.constant dense<0.000000e+00> : vector<104x32xf32>
    %17 = tpu.matmul %15, %16, %cst_12 {dimension_numbers = #tpu.dot_dimension_numbers<[1], [0], [0], [1], [0, 0, 1, 1], [], []>} : vector<104x64xf32>, vector<64x32xf32>, vector<104x32xf32> -> vector<104x32xf32>
    %18 = vector.extract_strided_slice %0 {offsets = [2, 0], sizes = [1, 32], strides = [1, 1]} : vector<4x128xf32> to vector<1x32xf32>
    %19 = vector.broadcast %18 : vector<1x32xf32> to vector<104x32xf32>
    %20 = arith.addf %17, %19 : vector<104x32xf32>
    %cst_13 = arith.constant 0.000000e+00 : f32
    %21 = vector.broadcast %cst_13 : f32 to vector<104x32xf32>
    %22 = arith.maximumf %20, %21 : vector<104x32xf32>
    %c0_14 = arith.constant 0 : index
    %c0_15 = arith.constant 0 : index
    %23 = vector.load %arg5[%c0_14, %c0_15] : memref<1x32xf32, #tpu.memory_space<vmem>>, vector<1x32xf32>
    %24 = vector.broadcast %23 : vector<1x32xf32> to vector<104x32xf32>
    %25 = arith.mulf %22, %24 : vector<104x32xf32>
    %cst_16 = arith.constant dense<0.000000e+00> : vector<104xf32>
    %26 = vector.multi_reduction <add>, %25, %cst_16 [1] : vector<104x32xf32> to vector<104xf32>
    %27 = vector.shape_cast %26 : vector<104xf32> to vector<104x1xf32>
    %28 = vector.extract_strided_slice %0 {offsets = [3, 0], sizes = [1, 1], strides = [1, 1]} : vector<4x128xf32> to vector<1x1xf32>
    %29 = vector.broadcast %28 : vector<1x1xf32> to vector<104x1xf32>
    %30 = arith.addf %27, %29 : vector<104x1xf32>
    %cst_17 = arith.constant 5.000000e-01 : f32
    %31 = vector.broadcast %cst_17 : f32 to vector<104x1xf32>
    %32 = arith.mulf %31, %30 : vector<104x1xf32>
    %33 = math.tanh %32 : vector<104x1xf32>
    %cst_18 = arith.constant 5.000000e-01 : f32
    %34 = vector.broadcast %cst_18 : f32 to vector<104x1xf32>
    %35 = arith.mulf %34, %33 : vector<104x1xf32>
    %cst_19 = arith.constant 5.000000e-01 : f32
    %36 = vector.broadcast %cst_19 : f32 to vector<104x1xf32>
    %37 = arith.addf %35, %36 : vector<104x1xf32>
    %c0_20 = arith.constant 0 : index
    %c0_21 = arith.constant 0 : index
    %38 = vector.load %arg7[%c0_20, %c0_21] : memref<104x1xf32, #tpu.memory_space<vmem>>, vector<104x1xf32>
    tpu.vector_store %arg7[%c0_20, %c0_21], %37 {strides = array<i32>} : memref<104x1xf32, #tpu.memory_space<vmem>>, vector<104x1xf32>,
    return
  }
  func.func @transform_0(%arg0: i32) -> (i32, i32) {
    %c0_i32 = arith.constant 0 : i32
    %c0_i32_0 = arith.constant 0 : i32
    return %arg0, %c0_i32 : i32, i32
  }
  func.func @transform_1(%arg0: i32) -> (i32, i32) {
    %c0_i32 = arith.constant 0 : i32
    %c0_i32_0 = arith.constant 0 : i32
    %c0_i32_1 = arith.constant 0 : i32
    return %c0_i32, %c0_i32_0 : i32, i32
  }
  func.func @transform_2(%arg0: i32) -> (i32, i32) {
    %c0_i32 = arith.constant 0 : i32
    %c0_i32_0 = arith.constant 0 : i32
    %c0_i32_1 = arith.constant 0 : i32
    return %c0_i32, %c0_i32_0 : i32, i32
  }
  func.func @transform_3(%arg0: i32) -> (i32, i32) {
    %c0_i32 = arith.constant 0 : i32
    %c0_i32_0 = arith.constant 0 : i32
    %c0_i32_1 = arith.constant 0 : i32
    return %c0_i32, %c0_i32_0 : i32, i32
  }
  func.func @transform_4(%arg0: i32) -> (i32, i32) {
    %c0_i32 = arith.constant 0 : i32
    %c0_i32_0 = arith.constant 0 : i32
    %c0_i32_1 = arith.constant 0 : i32
    return %c0_i32, %c0_i32_0 : i32, i32
  }
  func.func @transform_5(%arg0: i32) -> (i32, i32) {
    %c0_i32 = arith.constant 0 : i32
    %c0_i32_0 = arith.constant 0 : i32
    %c0_i32_1 = arith.constant 0 : i32
    return %c0_i32, %c0_i32_0 : i32, i32
  }
  func.func @transform_6(%arg0: i32) -> (i32, i32) {
    %c0_i32 = arith.constant 0 : i32
    %c0_i32_0 = arith.constant 0 : i32
    return %arg0, %c0_i32 : i32, i32
  }
}

</mosaic_0001>

<llo_original>
// kernel: tpu_custom_call.1
$region0: #{tpu_custom_call.1}
  #allocation0 [shape = 'u32[]', space=smem, size = 0x4, offset = 0x4, fixed_abs, tag = 'smem constant byte address 0x4 - core index']
  #allocation1 [shape = 'u32[144,128]{1,0:T(1,128)}', space=vmem, size = 0x12000, scoped, tag = 'internal scratch']
  %s0 = inlined_call_operand.vmem [shape: f32[200,16], index: 0, kind: input, shape index: {}]
  %s1 = inlined_call_operand.vmem [shape: f32[16,32], index: 1, kind: input, shape index: {}]
  %s2 = inlined_call_operand.vmem [shape: f32[32,64], index: 2, kind: input, shape index: {}]
  %s3 = inlined_call_operand.vmem [shape: f32[64,32], index: 3, kind: input, shape index: {}]
  %s4 = inlined_call_operand.vmem [shape: f32[1,32], index: 4, kind: input, shape index: {}]
  %s5 = inlined_call_operand.vmem [shape: f32[4,128], index: 5, kind: input, shape index: {}]
  %s6 = inlined_call_operand.vmem [shape: f32[200,1], index: 6, kind: output, shape index: {}]
  %s7 = sld [smem:[#allocation0]]
  $region105: #{tpu_custom_call.1} parent=0
    _
  %s9 = ssub.s32 1, %s7
  %s10 = scalar_select 0, %s9, %s7
  $region1: #{tpu_custom_call.1} parent=0
    #allocation2 [shape = 'u8[106496]{0}', space=vmem, size = 0x1a000, scoped, tag = 'output window, operand 0']
    loop: start=0, step=1, limit=4
    $region2: #{tpu_custom_call.1} parent=1 // loop_pre_header
      _
    $region3: #{tpu_custom_call.1} parent=1 // loop_header
      %s12 = sphi 0, %s16
      %p13 = scmp.ge.s32.totalorder %s12, 4
      %s22 = sphi 0, %s24
      %s25 = sphi 0, %s22
      %s26 = sphi 0, %s25
      %s42 = sphi 0, %s26
      %s46 = sphi 0, %s46
      %s48 = sphi 0, %s46
      %s49 = sphi 0, %s48
      %s63 = sphi 0, %s49
      %s67 = sphi 0, %s67
      %s69 = sphi 0, %s67
      %s70 = sphi 0, %s69
      %s84 = sphi 0, %s70
      %s88 = sphi 0, %s88
      %s90 = sphi 0, %s88
      %s91 = sphi 0, %s90
      %s105 = sphi 0, %s91
      %s109 = sphi 0, %s109
      %s111 = sphi 0, %s109
      %s112 = sphi 0, %s111
      %s126 = sphi 0, %s112
      %s130 = sphi 0, %s130
      %s132 = sphi 0, %s130
      %s133 = sphi 0, %s132
      %s147 = sphi 0, %s133
      %s153 = sphi 0, %s155
      %s156 = sphi 0, %s153
      %s157 = sphi 0, %s156
      %s173 = sphi 0, %s157
    $region4: #{tpu_custom_call.1} parent=1 // loop_header_branch
      %15 = sbr.rel (%p13) target = $region8
    $region5: #{tpu_custom_call.1} parent=1 // loop_body
      %s17 = ssub.s32 %s12, 1
      %s18 = ssub.s32 %s12, 2
      %s19 = sadd.s32 %s12, 1
      %s20 = ssub.s32 %s12, %s19
      %p21 = scmp.eq.s32.totalorder %s20, 0
      %s23 = sadd.s32 %s22, 1
      %s24 = scalar_select %p21, %s22, %s23
      %p27 = pneg %p21
      %p28 = scmp.eq.s32.totalorder %s12, 1
      %p29 = por %p27, %p28
      %p30 = scmp.ne.s32.totalorder %s22, %s25
      %p31 = scmp.eq.s32.totalorder %s12, 0
      %p32 = por %p30, %p31
      %p33 = scmp.ne.s32.totalorder %s22, %s25
      %p34 = scmp.eq.s32.totalorder %s17, 1
      %p35 = por %p33, %p34
      %p36 = scmp.ne.s32.totalorder %s25, %s26
      %p37 = scmp.eq.s32.totalorder %s17, 0
      %p38 = por %p36, %p37
      %p39 = scmp.ne.s32.totalorder %s25, %s26
      %p40 = scmp.eq.s32.totalorder %s18, 1
      %p41 = por %p39, %p40
      %p43 = scmp.ne.s32.totalorder %s26, %s42
      %p44 = scmp.eq.s32.totalorder %s18, 0
      %p45 = por %p43, %p44
      %s47 = sadd.s32 %s46, 1
      %p50 = scmp.eq.s32.totalorder %s12, 1
      %p51 = scmp.ne.s32.totalorder %s46, %s48
      %p52 = scmp.eq.s32.totalorder %s12, 0
      %p53 = por %p51, %p52
      %p54 = scmp.ne.s32.totalorder %s46, %s48
      %p55 = scmp.eq.s32.totalorder %s17, 1
      %p56 = por %p54, %p55
      %p57 = scmp.ne.s32.totalorder %s48, %s49
      %p58 = scmp.eq.s32.totalorder %s17, 0
      %p59 = por %p57, %p58
      %p60 = scmp.ne.s32.totalorder %s48, %s49
      %p61 = scmp.eq.s32.totalorder %s18, 1
      %p62 = por %p60, %p61
      %p64 = scmp.ne.s32.totalorder %s49, %s63
      %p65 = scmp.eq.s32.totalorder %s18, 0
      %p66 = por %p64, %p65
      %s68 = sadd.s32 %s67, 1
      %p71 = scmp.eq.s32.totalorder %s12, 1
      %p72 = scmp.ne.s32.totalorder %s67, %s69
      %p73 = scmp.eq.s32.totalorder %s12, 0
      %p74 = por %p72, %p73
      %p75 = scmp.ne.s32.totalorder %s67, %s69
      %p76 = scmp.eq.s32.totalorder %s17, 1
      %p77 = por %p75, %p76
      %p78 = scmp.ne.s32.totalorder %s69, %s70
      %p79 = scmp.eq.s32.totalorder %s17, 0
      %p80 = por %p78, %p79
      %p81 = scmp.ne.s32.totalorder %s69, %s70
      %p82 = scmp.eq.s32.totalorder %s18, 1
      %p83 = por %p81, %p82
      %p85 = scmp.ne.s32.totalorder %s70, %s84
      %p86 = scmp.eq.s32.totalorder %s18, 0
      %p87 = por %p85, %p86
      %s89 = sadd.s32 %s88, 1
      %p92 = scmp.eq.s32.totalorder %s12, 1
      %p93 = scmp.ne.s32.totalorder %s88, %s90
      %p94 = scmp.eq.s32.totalorder %s12, 0
      %p95 = por %p93, %p94
      %p96 = scmp.ne.s32.totalorder %s88, %s90
      %p97 = scmp.eq.s32.totalorder %s17, 1
      %p98 = por %p96, %p97
      %p99 = scmp.ne.s32.totalorder %s90, %s91
      %p100 = scmp.eq.s32.totalorder %s17, 0
      %p101 = por %p99, %p100
      %p102 = scmp.ne.s32.totalorder %s90, %s91
      %p103 = scmp.eq.s32.totalorder %s18, 1
      %p104 = por %p102, %p103
      %p106 = scmp.ne.s32.totalorder %s91, %s105
      %p107 = scmp.eq.s32.totalorder %s18, 0
      %p108 = por %p106, %p107
      %s110 = sadd.s32 %s109, 1
      %p113 = scmp.eq.s32.totalorder %s12, 1
      %p114 = scmp.ne.s32.totalorder %s109, %s111
      %p115 = scmp.eq.s32.totalorder %s12, 0
      %p116 = por %p114, %p115
      %p117 = scmp.ne.s32.totalorder %s109, %s111
      %p118 = scmp.eq.s32.totalorder %s17, 1
      %p119 = por %p117, %p118
      %p120 = scmp.ne.s32.totalorder %s111, %s112
      %p121 = scmp.eq.s32.totalorder %s17, 0
      %p122 = por %p120, %p121
      %p123 = scmp.ne.s32.totalorder %s111, %s112
      %p124 = scmp.eq.s32.totalorder %s18, 1
      %p125 = por %p123, %p124
      %p127 = scmp.ne.s32.totalorder %s112, %s126
      %p128 = scmp.eq.s32.totalorder %s18, 0
      %p129 = por %p127, %p128
      %s131 = sadd.s32 %s130, 1
      %p134 = scmp.eq.s32.totalorder %s12, 1
      %p135 = scmp.ne.s32.totalorder %s130, %s132
      %p136 = scmp.eq.s32.totalorder %s12, 0
      %p137 = por %p135, %p136
      %p138 = scmp.ne.s32.totalorder %s130, %s132
      %p139 = scmp.eq.s32.totalorder %s17, 1
      %p140 = por %p138, %p139
      %p141 = scmp.ne.s32.totalorder %s132, %s133
      %p142 = scmp.eq.s32.totalorder %s17, 0
      %p143 = por %p141, %p142
      %p144 = scmp.ne.s32.totalorder %s132, %s133
      %p145 = scmp.eq.s32.totalorder %s18, 1
      %p146 = por %p144, %p145
      %p148 = scmp.ne.s32.totalorder %s133, %s147
      %p149 = scmp.eq.s32.totalorder %s18, 0
      %p150 = por %p148, %p149
      %s151 = ssub.s32 %s12, %s19
      %p152 = scmp.eq.s32.totalorder %s151, 0
      %s154 = sadd.s32 %s153, 1
      %s155 = scalar_select %p152, %s153, %s154
      %p158 = pneg %p152
      %p159 = scmp.eq.s32.totalorder %s12, 1
      %p160 = por %p158, %p159
      %p161 = scmp.ne.s32.totalorder %s153, %s156
      %p162 = scmp.eq.s32.totalorder %s12, 0
      %p163 = por %p161, %p162
      %p164 = scmp.ne.s32.totalorder %s153, %s156
      %p165 = scmp.eq.s32.totalorder %s17, 1
      %p166 = por %p164, %p165
      %p167 = scmp.ne.s32.totalorder %s156, %s157
      %p168 = scmp.eq.s32.totalorder %s17, 0
      %p169 = por %p167, %p168
      %p170 = scmp.ne.s32.totalorder %s156, %s157
      %p171 = scmp.eq.s32.totalorder %s18, 1
      %p172 = por %p170, %p171
      %p174 = scmp.ne.s32.totalorder %s157, %s173
      %p175 = scmp.eq.s32.totalorder %s18, 0
      %p176 = por %p174, %p175
      %p177 = scmp.le.s32.totalorder 1, %s12
      %p178 = scmp.lt.s32.totalorder %s12, 3
      %p179 = pnand %p177, %p178
      %p180 = pneg %p179
      // Predicated region
      $region9: #{tpu_custom_call.1} parent=5 // pred_check
        _
      $region10: #{tpu_custom_call.1} parent=5 // pred_check_branch
        %182 = sbr.rel (%p179) target = $region12
      $region11: #{tpu_custom_call.1} parent=5 // pred_region
        %s183 = ssub.s32 %s12, 1
        // Predicated region
        $region13: #{tpu_custom_call.1} parent=11 // pred_check
          %p184 = pneg %p59
        $region14: #{tpu_custom_call.1} parent=11 // pred_check_branch
          %186 = sbr.rel (%p184) target = $region16
        $region15: #{tpu_custom_call.1} parent=11 // pred_region
          _
        $region16: #{tpu_custom_call.1} parent=11 // pred_fallthru
          _
        // Predicated region
        $region17: #{tpu_custom_call.1} parent=11 // pred_check
          %p187 = pneg %p80
        $region18: #{tpu_custom_call.1} parent=11 // pred_check_branch
          %189 = sbr.rel (%p187) target = $region20
        $region19: #{tpu_custom_call.1} parent=11 // pred_region
          _
        $region20: #{tpu_custom_call.1} parent=11 // pred_fallthru
          _
        // Predicated region
        $region21: #{tpu_custom_call.1} parent=11 // pred_check
          %p190 = pneg %p101
        $region22: #{tpu_custom_call.1} parent=11 // pred_check_branch
          %192 = sbr.rel (%p190) target = $region24
        $region23: #{tpu_custom_call.1} parent=11 // pred_region
          _
        $region24: #{tpu_custom_call.1} parent=11 // pred_fallthru
          _
        // Predicated region
        $region25: #{tpu_custom_call.1} parent=11 // pred_check
          %p193 = pneg %p122
        $region26: #{tpu_custom_call.1} parent=11 // pred_check_branch
          %195 = sbr.rel (%p193) target = $region28
        $region27: #{tpu_custom_call.1} parent=11 // pred_region
          _
        $region28: #{tpu_custom_call.1} parent=11 // pred_fallthru
          _
        // Predicated region
        $region29: #{tpu_custom_call.1} parent=11 // pred_check
          %p196 = pneg %p143
        $region30: #{tpu_custom_call.1} parent=11 // pred_check_branch
          %198 = sbr.rel (%p196) target = $region32
        $region31: #{tpu_custom_call.1} parent=11 // pred_region
          _
        $region32: #{tpu_custom_call.1} parent=11 // pred_fallthru
          _
      $region12: #{tpu_custom_call.1} parent=5 // pred_fallthru
        _
      %p199 = scmp.lt.s32.totalorder %s12, 2
      // Predicated region
      $region33: #{tpu_custom_call.1} parent=5 // pred_check
        %p200 = pneg %p199
      $region34: #{tpu_custom_call.1} parent=5 // pred_check_branch
        %202 = sbr.rel (%p200) target = $region36
      $region35: #{tpu_custom_call.1} parent=5 // pred_region
        // Predicated region
        $region37: #{tpu_custom_call.1} parent=35 // pred_check
          %p203 = pneg %p32
        $region38: #{tpu_custom_call.1} parent=35 // pred_check_branch
          %205 = sbr.rel (%p203) target = $region40
        $region39: #{tpu_custom_call.1} parent=35 // pred_region
          %s206 = smul.u32 13, %s12
          %s207 = ssub.s32 25, %s206
          %p208 = scmp.lt.s32.totalorder %s207, 13
          %s209 = scalar_select %p208, %s207, 13
          %s210 = smul.u32 128, %s209
          %p211 = scmp.lt.s32.totalorder %s206, 24
          %s212 = scalar_select %p211, %s206, 24
          %s213 = smul.addr %s212, 8
          %s214 = scalar_lea.vmem %s0, %s213
          %s215 = smul.u32 13, %s12
          %s216 = ssub.s32 25, %s215
          %p217 = scmp.lt.s32.totalorder %s216, 13
          %s218 = scalar_select %p217, %s216, 13
          %s219 = smul.u32 128, %s218
        $region40: #{tpu_custom_call.1} parent=35 // pred_fallthru
          _
      $region36: #{tpu_custom_call.1} parent=5 // pred_fallthru
        _
      %p220 = scmp.le.s32.totalorder 1, %s12
      %p221 = scmp.lt.s32.totalorder %s12, 3
      %p222 = pnand %p220, %p221
      %p223 = pneg %p222
      // Predicated region
      $region41: #{tpu_custom_call.1} parent=5 // pred_check
        _
      $region42: #{tpu_custom_call.1} parent=5 // pred_check_branch
        %225 = sbr.rel (%p222) target = $region44
      $region43: #{tpu_custom_call.1} parent=5 // pred_region
        %s226 = ssub.s32 %s12, 1
        %s227 = smul.u32 13, %s17
        %s228 = ssub.s32 25, %s227
        %p229 = scmp.lt.s32.totalorder %s228, 13
        %s230 = scalar_select %p229, %s228, 13
        %s231 = smul.u32 128, %s230
        %p232 = scmp.lt.s32.totalorder %s227, 24
        %s233 = scalar_select %p232, %s227, 24
        %s234 = smul.addr %s233, 8
        %s235 = scalar_lea.vmem %s0, %s234
        %p236 = pneg %p38
        %p237 = pneg %p35
        %p238 = pneg %p59
        %p239 = pneg %p56
        %p240 = pneg %p80
        %p241 = pneg %p77
        %p242 = pneg %p101
        %p243 = pneg %p98
        %p244 = pneg %p122
        %p245 = pneg %p119
        %p246 = pneg %p143
        %p247 = pneg %p140
        %p248 = pneg %p169
        %p249 = pneg %p166
        %s250 = sand.u32 %s156, 1
        %s251 = sand.u32 %s156, 1
        %s252 = smul.addr %s251, 104
        %s253 = scalar_lea.vmem [#allocation2], %s252
        %s254 = smul.u32 13, %s17
        %s255 = ssub.s32 25, %s254
        %p256 = scmp.lt.s32.totalorder %s255, 13
        %s257 = scalar_select %p256, %s255, 13
        %s258 = smul.u32 128, %s257
        %p259 = scmp.lt.s32.totalorder %s254, 24
        %s260 = scalar_select %p259, %s254, 24
        %s261 = smul.addr %s260, 8
        %s262 = scalar_lea.vmem %s0, %s261
        %s263 = smul.u32 13, %s17
        %s264 = ssub.s32 25, %s263
        %p265 = scmp.lt.s32.totalorder %s264, 13
        %s266 = scalar_select %p265, %s264, 13
        %s267 = smul.u32 128, %s266
        %s268 = smul.u32 13, %s17
        %s269 = ssub.s32 25, %s268
        %p270 = scmp.lt.s32.totalorder %s269, 13
        %s271 = scalar_select %p270, %s269, 13
        %s272 = smul.u32 128, %s271
        %v273 = vld [vmem:[%s5] sm:$0xf]
        %v274 = vld [vmem:[%s262] sm:$0xff]
        %v275 = vld [vmem:[%s262 + $0x8] sm:$0xff]
        %v276 = vld [vmem:[%s262 + $0x10] sm:$0xff]
        %v277 = vld [vmem:[%s262 + $0x18] sm:$0xff]
        %v278 = vld [vmem:[%s262 + $0x20] sm:$0xff]
        %v279 = vld [vmem:[%s262 + $0x28] sm:$0xff]
        %v280 = vld [vmem:[%s262 + $0x30] sm:$0xff]
        %v281 = vld [vmem:[%s262 + $0x38] sm:$0xff]
        %v282 = vld [vmem:[%s262 + $0x40] sm:$0xff]
        %v283 = vld [vmem:[%s262 + $0x48] sm:$0xff]
        %v284 = vld [vmem:[%s262 + $0x50] sm:$0xff]
        %v285 = vld [vmem:[%s262 + $0x58] sm:$0xff]
        %v286 = vld [vmem:[%s262 + $0x60] sm:$0xff]
        %v287 = vld [vmem:[%s1] sm:$0xff]
        %v288 = vld [vmem:[%s1 + $0x8] sm:$0xff]
        %v289 = vlaneseq
        %v290 = vshrl.u32 %v289, 7
        %v291 = vsub.s32 0, %v290
        %v292 = vrot.slane %v273, %v291
        %vm293 = vcmask 130048
        %v295 = vsel %vm293, %v274, 0
        %v298 = vsel %vm293, %v275, 0
        %v301 = vsel %vm293, %v276, 0
        %v304 = vsel %vm293, %v277, 0
        %v307 = vsel %vm293, %v278, 0
        %v310 = vsel %vm293, %v279, 0
        %v313 = vsel %vm293, %v280, 0
        %v316 = vsel %vm293, %v281, 0
        %v319 = vsel %vm293, %v282, 0
        %v322 = vsel %vm293, %v283, 0
        %v325 = vsel %vm293, %v284, 0
        %v328 = vsel %vm293, %v285, 0
        %v331 = vsel %vm293, %v286, 0
        %333 = vmatprep.subr.mxu0 0.0
        %334 = vmatpush1.msra.mxu0 %v287
        %335 = vmatprep.subr.mxu0 0.0
        %336 = vmatpush1.msra.mxu0 %v288
        %337 = vmatprep.subr.mxu0 0.0
        %338 = vmatpush1.msra.mxu0 0.0
        %339 = vmatprep.subr.mxu0 0.0
        %340 = vmatpush1.msra.mxu0 0.0
        %341 = vmatprep.subr.mxu0 0.0
        %342 = vmatpush1.msra.mxu0 0.0
        %343 = vmatprep.subr.mxu0 0.0
        %344 = vmatpush1.msra.mxu0 0.0
        %345 = vmatprep.subr.mxu0 0.0
        %346 = vmatpush1.msra.mxu0 0.0
        %347 = vmatprep.subr.mxu0 0.0
        %348 = vmatpush1.msra.mxu0 0.0
        %349 = vmatprep.subr.mxu0 0.0
        %350 = vmatpush1.msra.mxu0 0.0
        %351 = vmatprep.subr.mxu0 0.0
        %352 = vmatpush1.msra.mxu0 0.0
        %353 = vmatprep.subr.mxu0 0.0
        %354 = vmatpush1.msra.mxu0 0.0
        %355 = vmatprep.subr.mxu0 0.0
        %356 = vmatpush1.msra.mxu0 0.0
        %357 = vmatprep.subr.mxu0 0.0
        %358 = vmatpush1.msra.mxu0 0.0
        %359 = vmatprep.subr.mxu0 0.0
        %360 = vmatpush1.msra.mxu0 0.0
        %361 = vmatprep.subr.mxu0 0.0
        %362 = vmatpush1.msra.mxu0 0.0
        %363 = vmatprep.subr.mxu0 0.0
        %364 = vmatpush1.msra.mxu0 0.0
        %365 = vmatprep.subr.mxu0 0.0
        %366 = vmatpush1.msra.mxu0 0.0
        %367 = vmatprep.subr.mxu0 0.0
        %368 = vmatpush1.msra.mxu0 0.0
        %369 = vmatprep.subr.mxu0 0.0
        %370 = vmatpush1.msra.mxu0 0.0
        %371 = vmatprep.subr.mxu0 0.0
        %372 = vmatpush1.msra.mxu0 0.0
        %373 = vmatprep.subr.mxu0 0.0
        %374 = vmatpush1.msra.mxu0 0.0
        %375 = vmatprep.subr.mxu0 0.0
        %376 = vmatpush1.msra.mxu0 0.0
        %377 = vmatprep.subr.mxu0 0.0
        %378 = vmatpush1.msra.mxu0 0.0
        %379 = vmatprep.subr.mxu0 0.0
        %380 = vmatpush1.msra.mxu0 0.0
        %381 = vmatprep.subr.mxu0 0.0
        %382 = vmatpush1.msra.mxu0 0.0
        %383 = vmatprep.subr.mxu0 0.0
        %384 = vmatpush1.msra.mxu0 0.0
        %385 = vmatprep.subr.mxu0 0.0
        %386 = vmatpush1.msra.mxu0 0.0
        %387 = vmatprep.subr.mxu0 0.0
        %388 = vmatpush1.msra.mxu0 0.0
        %389 = vmatprep.subr.mxu0 0.0
        %390 = vmatpush1.msra.mxu0 0.0
        %391 = vmatprep.subr.mxu0 0.0
        %392 = vmatpush1.msra.mxu0 0.0
        %393 = vmatprep.subr.mxu0 0.0
        %394 = vmatpush1.msra.mxu0 0.0
        %395 = vmatprep.subr.mxu0 0.0
        %396 = vmatpush1.msra.mxu0 0.0
        %397 = vmatprep.mubr.f32.mxu0 0.0
        %398 = vmatmul.mubr.f32.gmra.mrb[0].mxu0 %v295
        %v399 = vpop.f32.mrb[0].mxu0
        %v400 = vadd.f32 %v292, %v399
        %v401 = vpop.f32.mrb[0].mxu0
        %402 = vmatprep.mubr.f32.mxu0 0.0
        %403 = vmatmul.mubr.f32.gmra.mrb[0].mxu0 %v298
        %v404 = vpop.f32.mrb[0].mxu0
        %v405 = vadd.f32 %v292, %v404
        %v406 = vpop.f32.mrb[0].mxu0
        %407 = vmatprep.mubr.f32.mxu0 0.0
        %408 = vmatmul.mubr.f32.gmra.mrb[0].mxu0 %v301
        %v409 = vpop.f32.mrb[0].mxu0
        %v410 = vadd.f32 %v292, %v409
        %v411 = vpop.f32.mrb[0].mxu0
        %412 = vmatprep.mubr.f32.mxu0 0.0
        %413 = vmatmul.mubr.f32.gmra.mrb[0].mxu0 %v304
        %v414 = vpop.f32.mrb[0].mxu0
        %v415 = vadd.f32 %v292, %v414
        %v416 = vpop.f32.mrb[0].mxu0
        %417 = vmatprep.mubr.f32.mxu0 0.0
        %418 = vmatmul.mubr.f32.gmra.mrb[0].mxu0 %v307
        %v419 = vpop.f32.mrb[0].mxu0
        %v420 = vadd.f32 %v292, %v419
        %v421 = vpop.f32.mrb[0].mxu0
        %422 = vmatprep.mubr.f32.mxu0 0.0
        %423 = vmatmul.mubr.f32.gmra.mrb[0].mxu0 %v310
        %v424 = vpop.f32.mrb[0].mxu0
        %v425 = vadd.f32 %v292, %v424
        %v426 = vpop.f32.mrb[0].mxu0
        %427 = vmatprep.mubr.f32.mxu0 0.0
        %428 = vmatmul.mubr.f32.gmra.mrb[0].mxu0 %v313
        %v429 = vpop.f32.mrb[0].mxu0
        %v430 = vadd.f32 %v292, %v429
        %v431 = vpop.f32.mrb[0].mxu0
        %432 = vmatprep.mubr.f32.mxu0 0.0
        %433 = vmatmul.mubr.f32.gmra.mrb[0].mxu0 %v316
        %v434 = vpop.f32.mrb[0].mxu0
        %v435 = vadd.f32 %v292, %v434
        %v436 = vpop.f32.mrb[0].mxu0
        %437 = vmatprep.mubr.f32.mxu0 0.0
        %438 = vmatmul.mubr.f32.gmra.mrb[0].mxu0 %v319
        %v439 = vpop.f32.mrb[0].mxu0
        %v440 = vadd.f32 %v292, %v439
        %v441 = vpop.f32.mrb[0].mxu0
        %442 = vmatprep.mubr.f32.mxu0 0.0
        %443 = vmatmul.mubr.f32.gmra.mrb[0].mxu0 %v322
        %v444 = vpop.f32.mrb[0].mxu0
        %v445 = vadd.f32 %v292, %v444
        %v446 = vpop.f32.mrb[0].mxu0
        %447 = vmatprep.mubr.f32.mxu0 0.0
        %448 = vmatmul.mubr.f32.gmra.mrb[0].mxu0 %v325
        %v449 = vpop.f32.mrb[0].mxu0
        %v450 = vadd.f32 %v292, %v449
        %v451 = vpop.f32.mrb[0].mxu0
        %452 = vmatprep.mubr.f32.mxu0 0.0
        %453 = vmatmul.mubr.f32.gmra.mrb[0].mxu0 %v328
        %v454 = vpop.f32.mrb[0].mxu0
        %v455 = vadd.f32 %v292, %v454
        %v456 = vpop.f32.mrb[0].mxu0
        %457 = vmatprep.mubr.f32.mxu0 0.0
        %458 = vmatmul.mubr.f32.gmra.mrb[0].mxu0 %v331
        %v459 = vpop.f32.mrb[0].mxu0
        %v460 = vadd.f32 %v292, %v459
        %v461 = vpop.f32.mrb[0].mxu0
        %462 = vdwg.mxu0
        %v463 = vmax.f32 %v400, 0.0
        %v464 = vmax.f32 %v405, 0.0
        %v465 = vmax.f32 %v410, 0.0
        %v466 = vmax.f32 %v415, 0.0
        %v467 = vmax.f32 %v420, 0.0
        %v468 = vmax.f32 %v425, 0.0
        %v469 = vmax.f32 %v430, 0.0
        %v470 = vmax.f32 %v435, 0.0
        %v471 = vmax.f32 %v440, 0.0
        %v472 = vmax.f32 %v445, 0.0
        %v473 = vmax.f32 %v450, 0.0
        %v474 = vmax.f32 %v455, 0.0
        %v475 = vmax.f32 %v460, 0.0
        %v476 = vld [vmem:[%s2] sm:$0xff]
        %v477 = vld [vmem:[%s2 + $0x8] sm:$0xff]
        %v478 = vld [vmem:[%s2 + $0x10] sm:$0xff]
        %v479 = vld [vmem:[%s2 + $0x18] sm:$0xff]
        %v480 = vlaneseq
        %v481 = vshrl.u32 %v480, 7
        %v482 = vsub.s32 1, %v481
        %v483 = vrot.slane %v273, %v482
        %vm484 = vcmask 261120
        %v486 = vsel %vm484, %v463, 0
        %v489 = vsel %vm484, %v464, 0
        %v492 = vsel %vm484, %v465, 0
        %v495 = vsel %vm484, %v466, 0
        %v498 = vsel %vm484, %v467, 0
        %v501 = vsel %vm484, %v468, 0
        %v504 = vsel %vm484, %v469, 0
        %v507 = vsel %vm484, %v470, 0
        %v510 = vsel %vm484, %v471, 0
        %v513 = vsel %vm484, %v472, 0
        %v516 = vsel %vm484, %v473, 0
        %v519 = vsel %vm484, %v474, 0
        %v522 = vsel %vm484, %v475, 0
        %524 = vmatprep.subr.mxu0 0.0
        %525 = vmatpush1.msra.mxu0 %v476
        %526 = vmatprep.subr.mxu0 0.0
        %527 = vmatpush1.msra.mxu0 %v477
        %528 = vmatprep.subr.mxu0 0.0
        %529 = vmatpush1.msra.mxu0 %v478
        %530 = vmatprep.subr.mxu0 0.0
        %531 = vmatpush1.msra.mxu0 %v479
        %532 = vmatprep.subr.mxu0 0.0
        %533 = vmatpush1.msra.mxu0 0.0
        %534 = vmatprep.subr.mxu0 0.0
        %535 = vmatpush1.msra.mxu0 0.0
        %536 = vmatprep.subr.mxu0 0.0
        %537 = vmatpush1.msra.mxu0 0.0
        %538 = vmatprep.subr.mxu0 0.0
        %539 = vmatpush1.msra.mxu0 0.0
        %540 = vmatprep.subr.mxu0 0.0
        %541 = vmatpush1.msra.mxu0 0.0
        %542 = vmatprep.subr.mxu0 0.0
        %543 = vmatpush1.msra.mxu0 0.0
        %544 = vmatprep.subr.mxu0 0.0
        %545 = vmatpush1.msra.mxu0 0.0
        %546 = vmatprep.subr.mxu0 0.0
        %547 = vmatpush1.msra.mxu0 0.0
        %548 = vmatprep.subr.mxu0 0.0
        %549 = vmatpush1.msra.mxu0 0.0
        %550 = vmatprep.subr.mxu0 0.0
        %551 = vmatpush1.msra.mxu0 0.0
        %552 = vmatprep.subr.mxu0 0.0
        %553 = vmatpush1.msra.mxu0 0.0
        %554 = vmatprep.subr.mxu0 0.0
        %555 = vmatpush1.msra.mxu0 0.0
        %556 = vmatprep.subr.mxu0 0.0
        %557 = vmatpush1.msra.mxu0 0.0
        %558 = vmatprep.subr.mxu0 0.0
        %559 = vmatpush1.msra.mxu0 0.0
        %560 = vmatprep.subr.mxu0 0.0
        %561 = vmatpush1.msra.mxu0 0.0
        %562 = vmatprep.subr.mxu0 0.0
        %563 = vmatpush1.msra.mxu0 0.0
        %564 = vmatprep.subr.mxu0 0.0
        %565 = vmatpush1.msra.mxu0 0.0
        %566 = vmatprep.subr.mxu0 0.0
        %567 = vmatpush1.msra.mxu0 0.0
        %568 = vmatprep.subr.mxu0 0.0
        %569 = vmatpush1.msra.mxu0 0.0
        %570 = vmatprep.subr.mxu0 0.0
        %571 = vmatpush1.msra.mxu0 0.0
        %572 = vmatprep.subr.mxu0 0.0
        %573 = vmatpush1.msra.mxu0 0.0
        %574 = vmatprep.subr.mxu0 0.0
        %575 = vmatpush1.msra.mxu0 0.0
        %576 = vmatprep.subr.mxu0 0.0
        %577 = vmatpush1.msra.mxu0 0.0
        %578 = vmatprep.subr.mxu0 0.0
        %579 = vmatpush1.msra.mxu0 0.0
        %580 = vmatprep.subr.mxu0 0.0
        %581 = vmatpush1.msra.mxu0 0.0
        %582 = vmatprep.subr.mxu0 0.0
        %583 = vmatpush1.msra.mxu0 0.0
        %584 = vmatprep.subr.mxu0 0.0
        %585 = vmatpush1.msra.mxu0 0.0
        %586 = vmatprep.subr.mxu0 0.0
        %587 = vmatpush1.msra.mxu0 0.0
        %588 = vmatprep.mubr.f32.mxu0 0.0
        %589 = vmatmul.mubr.f32.gmra.mrb[0].mxu0 %v486
        %v590 = vpop.f32.mrb[0].mxu0
        %v591 = vadd.f32 %v483, %v590
        %v592 = vpop.f32.mrb[0].mxu0
        %593 = vmatprep.mubr.f32.mxu0 0.0
        %594 = vmatmul.mubr.f32.gmra.mrb[0].mxu0 %v489
        %v595 = vpop.f32.mrb[0].mxu0
        %v596 = vadd.f32 %v483, %v595
        %v597 = vpop.f32.mrb[0].mxu0
        %598 = vmatprep.mubr.f32.mxu0 0.0
        %599 = vmatmul.mubr.f32.gmra.mrb[0].mxu0 %v492
        %v600 = vpop.f32.mrb[0].mxu0
        %v601 = vadd.f32 %v483, %v600
        %v602 = vpop.f32.mrb[0].mxu0
        %603 = vmatprep.mubr.f32.mxu0 0.0
        %604 = vmatmul.mubr.f32.gmra.mrb[0].mxu0 %v495
        %v605 = vpop.f32.mrb[0].mxu0
        %v606 = vadd.f32 %v483, %v605
        %v607 = vpop.f32.mrb[0].mxu0
        %608 = vmatprep.mubr.f32.mxu0 0.0
        %609 = vmatmul.mubr.f32.gmra.mrb[0].mxu0 %v498
        %v610 = vpop.f32.mrb[0].mxu0
        %v611 = vadd.f32 %v483, %v610
        %v612 = vpop.f32.mrb[0].mxu0
        %613 = vmatprep.mubr.f32.mxu0 0.0
        %614 = vmatmul.mubr.f32.gmra.mrb[0].mxu0 %v501
        %v615 = vpop.f32.mrb[0].mxu0
        %v616 = vadd.f32 %v483, %v615
        %v617 = vpop.f32.mrb[0].mxu0
        %618 = vmatprep.mubr.f32.mxu0 0.0
        %619 = vmatmul.mubr.f32.gmra.mrb[0].mxu0 %v504
        %v620 = vpop.f32.mrb[0].mxu0
        %v621 = vadd.f32 %v483, %v620
        %v622 = vpop.f32.mrb[0].mxu0
        %623 = vmatprep.mubr.f32.mxu0 0.0
        %624 = vmatmul.mubr.f32.gmra.mrb[0].mxu0 %v507
        %v625 = vpop.f32.mrb[0].mxu0
        %v626 = vadd.f32 %v483, %v625
        %v627 = vpop.f32.mrb[0].mxu0
        %628 = vmatprep.mubr.f32.mxu0 0.0
        %629 = vmatmul.mubr.f32.gmra.mrb[0].mxu0 %v510
        %v630 = vpop.f32.mrb[0].mxu0
        %v631 = vadd.f32 %v483, %v630
        %v632 = vpop.f32.mrb[0].mxu0
        %633 = vmatprep.mubr.f32.mxu0 0.0
        %634 = vmatmul.mubr.f32.gmra.mrb[0].mxu0 %v513
        %v635 = vpop.f32.mrb[0].mxu0
        %v636 = vadd.f32 %v483, %v635
        %v637 = vpop.f32.mrb[0].mxu0
        %638 = vmatprep.mubr.f32.mxu0 0.0
        %639 = vmatmul.mubr.f32.gmra.mrb[0].mxu0 %v516
        %v640 = vpop.f32.mrb[0].mxu0
        %v641 = vadd.f32 %v483, %v640
        %v642 = vpop.f32.mrb[0].mxu0
        %643 = vmatprep.mubr.f32.mxu0 0.0
        %644 = vmatmul.mubr.f32.gmra.mrb[0].mxu0 %v519
        %v645 = vpop.f32.mrb[0].mxu0
        %v646 = vadd.f32 %v483, %v645
        %v647 = vpop.f32.mrb[0].mxu0
        %648 = vmatprep.mubr.f32.mxu0 0.0
        %649 = vmatmul.mubr.f32.gmra.mrb[0].mxu0 %v522
        %v650 = vpop.f32.mrb[0].mxu0
        %v651 = vadd.f32 %v483, %v650
        %v652 = vpop.f32.mrb[0].mxu0
        %653 = vdwg.mxu0
        %v654 = vmax.f32 %v591, 0.0
        %v655 = vmax.f32 %v596, 0.0
        %v656 = vmax.f32 %v601, 0.0
        %v657 = vmax.f32 %v606, 0.0
        %v658 = vmax.f32 %v611, 0.0
        %v659 = vmax.f32 %v616, 0.0
        %v660 = vmax.f32 %v621, 0.0
        %v661 = vmax.f32 %v626, 0.0
        %v662 = vmax.f32 %v631, 0.0
        %v663 = vmax.f32 %v636, 0.0
        %v664 = vmax.f32 %v641, 0.0
        %v665 = vmax.f32 %v646, 0.0
        %v666 = vmax.f32 %v651, 0.0
        %v667 = vld [vmem:[%s3] sm:$0xff]
        %v668 = vld [vmem:[%s3 + $0x8] sm:$0xff]
        %v669 = vld [vmem:[%s3 + $0x10] sm:$0xff]
        %v670 = vld [vmem:[%s3 + $0x18] sm:$0xff]
        %v671 = vld [vmem:[%s3 + $0x20] sm:$0xff]
        %v672 = vld [vmem:[%s3 + $0x28] sm:$0xff]
        %v673 = vld [vmem:[%s3 + $0x30] sm:$0xff]
        %v674 = vld [vmem:[%s3 + $0x38] sm:$0xff]
        %v675 = vlaneseq
        %v676 = vshrl.u32 %v675, 7
        %v677 = vsub.s32 2, %v676
        %v678 = vrot.slane %v273, %v677
        %vm679 = vcmask 523264
        %v681 = vsel %vm679, %v654, 0
        %v684 = vsel %vm679, %v655, 0
        %v687 = vsel %vm679, %v656, 0
        %v690 = vsel %vm679, %v657, 0
        %v693 = vsel %vm679, %v658, 0
        %v696 = vsel %vm679, %v659, 0
        %v699 = vsel %vm679, %v660, 0
        %v702 = vsel %vm679, %v661, 0
        %v705 = vsel %vm679, %v662, 0
        %v708 = vsel %vm679, %v663, 0
        %v711 = vsel %vm679, %v664, 0
        %v714 = vsel %vm679, %v665, 0
        %v717 = vsel %vm679, %v666, 0
        %719 = vmatprep.subr.mxu0 0.0
        %720 = vmatpush1.msra.mxu0 %v667
        %721 = vmatprep.subr.mxu0 0.0
        %722 = vmatpush1.msra.mxu0 %v668
        %723 = vmatprep.subr.mxu0 0.0
        %724 = vmatpush1.msra.mxu0 %v669
        %725 = vmatprep.subr.mxu0 0.0
        %726 = vmatpush1.msra.mxu0 %v670
        %727 = vmatprep.subr.mxu0 0.0
        %728 = vmatpush1.msra.mxu0 %v671
        %729 = vmatprep.subr.mxu0 0.0
        %730 = vmatpush1.msra.mxu0 %v672
        %731 = vmatprep.subr.mxu0 0.0
        %732 = vmatpush1.msra.mxu0 %v673
        %733 = vmatprep.subr.mxu0 0.0
        %734 = vmatpush1.msra.mxu0 %v674
        %735 = vmatprep.subr.mxu0 0.0
        %736 = vmatpush1.msra.mxu0 0.0
        %737 = vmatprep.subr.mxu0 0.0
        %738 = vmatpush1.msra.mxu0 0.0
        %739 = vmatprep.subr.mxu0 0.0
        %740 = vmatpush1.msra.mxu0 0.0
        %741 = vmatprep.subr.mxu0 0.0
        %742 = vmatpush1.msra.mxu0 0.0
        %743 = vmatprep.subr.mxu0 0.0
        %744 = vmatpush1.msra.mxu0 0.0
        %745 = vmatprep.subr.mxu0 0.0
        %746 = vmatpush1.msra.mxu0 0.0
        %747 = vmatprep.subr.mxu0 0.0
        %748 = vmatpush1.msra.mxu0 0.0
        %749 = vmatprep.subr.mxu0 0.0
        %750 = vmatpush1.msra.mxu0 0.0
        %751 = vmatprep.subr.mxu0 0.0
        %752 = vmatpush1.msra.mxu0 0.0
        %753 = vmatprep.subr.mxu0 0.0
        %754 = vmatpush1.msra.mxu0 0.0
        %755 = vmatprep.subr.mxu0 0.0
        %756 = vmatpush1.msra.mxu0 0.0
        %757 = vmatprep.subr.mxu0 0.0
        %758 = vmatpush1.msra.mxu0 0.0
        %759 = vmatprep.subr.mxu0 0.0
        %760 = vmatpush1.msra.mxu0 0.0
        %761 = vmatprep.subr.mxu0 0.0
        %762 = vmatpush1.msra.mxu0 0.0
        %763 = vmatprep.subr.mxu0 0.0
        %764 = vmatpush1.msra.mxu0 0.0
        %765 = vmatprep.subr.mxu0 0.0
        %766 = vmatpush1.msra.mxu0 0.0
        %767 = vmatprep.subr.mxu0 0.0
        %768 = vmatpush1.msra.mxu0 0.0
        %769 = vmatprep.subr.mxu0 0.0
        %770 = vmatpush1.msra.mxu0 0.0
        %771 = vmatprep.subr.mxu0 0.0
        %772 = vmatpush1.msra.mxu0 0.0
        %773 = vmatprep.subr.mxu0 0.0
        %774 = vmatpush1.msra.mxu0 0.0
        %775 = vmatprep.subr.mxu0 0.0
        %776 = vmatpush1.msra.mxu0 0.0
        %777 = vmatprep.subr.mxu0 0.0
        %778 = vmatpush1.msra.mxu0 0.0
        %779 = vmatprep.subr.mxu0 0.0
        %780 = vmatpush1.msra.mxu0 0.0
        %781 = vmatprep.subr.mxu0 0.0
        %782 = vmatpush1.msra.mxu0 0.0
        %783 = vmatprep.mubr.f32.mxu0 0.0
        %784 = vmatmul.mubr.f32.gmra.mrb[0].mxu0 %v681
        %v785 = vpop.f32.mrb[0].mxu0
        %v786 = vadd.f32 %v678, %v785
        %v787 = vpop.f32.mrb[0].mxu0
        %788 = vmatprep.mubr.f32.mxu0 0.0
        %789 = vmatmul.mubr.f32.gmra.mrb[0].mxu0 %v684
        %v790 = vpop.f32.mrb[0].mxu0
        %v791 = vadd.f32 %v678, %v790
        %v792 = vpop.f32.mrb[0].mxu0
        %793 = vmatprep.mubr.f32.mxu0 0.0
        %794 = vmatmul.mubr.f32.gmra.mrb[0].mxu0 %v687
        %v795 = vpop.f32.mrb[0].mxu0
        %v796 = vadd.f32 %v678, %v795
        %v797 = vpop.f32.mrb[0].mxu0
        %798 = vmatprep.mubr.f32.mxu0 0.0
        %799 = vmatmul.mubr.f32.gmra.mrb[0].mxu0 %v690
        %v800 = vpop.f32.mrb[0].mxu0
        %v801 = vadd.f32 %v678, %v800
        %v802 = vpop.f32.mrb[0].mxu0
        %803 = vmatprep.mubr.f32.mxu0 0.0
        %804 = vmatmul.mubr.f32.gmra.mrb[0].mxu0 %v693
        %v805 = vpop.f32.mrb[0].mxu0
        %v806 = vadd.f32 %v678, %v805
        %v807 = vpop.f32.mrb[0].mxu0
        %808 = vmatprep.mubr.f32.mxu0 0.0
        %809 = vmatmul.mubr.f32.gmra.mrb[0].mxu0 %v696
        %v810 = vpop.f32.mrb[0].mxu0
        %v811 = vadd.f32 %v678, %v810
        %v812 = vpop.f32.mrb[0].mxu0
        %813 = vmatprep.mubr.f32.mxu0 0.0
        %814 = vmatmul.mubr.f32.gmra.mrb[0].mxu0 %v699
        %v815 = vpop.f32.mrb[0].mxu0
        %v816 = vadd.f32 %v678, %v815
        %v817 = vpop.f32.mrb[0].mxu0
        %818 = vmatprep.mubr.f32.mxu0 0.0
        %819 = vmatmul.mubr.f32.gmra.mrb[0].mxu0 %v702
        %v820 = vpop.f32.mrb[0].mxu0
        %v821 = vadd.f32 %v678, %v820
        %v822 = vpop.f32.mrb[0].mxu0
        %823 = vmatprep.mubr.f32.mxu0 0.0
        %824 = vmatmul.mubr.f32.gmra.mrb[0].mxu0 %v705
        %v825 = vpop.f32.mrb[0].mxu0
        %v826 = vadd.f32 %v678, %v825
        %v827 = vpop.f32.mrb[0].mxu0
        %828 = vmatprep.mubr.f32.mxu0 0.0
        %829 = vmatmul.mubr.f32.gmra.mrb[0].mxu0 %v708
        %v830 = vpop.f32.mrb[0].mxu0
        %v831 = vadd.f32 %v678, %v830
        %v832 = vpop.f32.mrb[0].mxu0
        %833 = vmatprep.mubr.f32.mxu0 0.0
        %834 = vmatmul.mubr.f32.gmra.mrb[0].mxu0 %v711
        %v835 = vpop.f32.mrb[0].mxu0
        %v836 = vadd.f32 %v678, %v835
        %v837 = vpop.f32.mrb[0].mxu0
        %838 = vmatprep.mubr.f32.mxu0 0.0
        %839 = vmatmul.mubr.f32.gmra.mrb[0].mxu0 %v714
        %v840 = vpop.f32.mrb[0].mxu0
        %v841 = vadd.f32 %v678, %v840
        %v842 = vpop.f32.mrb[0].mxu0
        %843 = vmatprep.mubr.f32.mxu0 0.0
        %844 = vmatmul.mubr.f32.gmra.mrb[0].mxu0 %v717
        %v845 = vpop.f32.mrb[0].mxu0
        %v846 = vadd.f32 %v678, %v845
        %v847 = vpop.f32.mrb[0].mxu0
        %848 = vdwg.mxu0
        %v849 = vmax.f32 %v786, 0.0
        %v850 = vmax.f32 %v791, 0.0
        %v851 = vmax.f32 %v796, 0.0
        %v852 = vmax.f32 %v801, 0.0
        %v853 = vmax.f32 %v806, 0.0
        %v854 = vmax.f32 %v811, 0.0
        %v855 = vmax.f32 %v816, 0.0
        %v856 = vmax.f32 %v821, 0.0
        %v857 = vmax.f32 %v826, 0.0
        %v858 = vmax.f32 %v831, 0.0
        %v859 = vmax.f32 %v836, 0.0
        %v860 = vmax.f32 %v841, 0.0
        %v861 = vmax.f32 %v846, 0.0
        %v862 = vld [vmem:[%s4] sm:$0x1]
        %v864 = vlaneseq
        %v865 = vshrl.u32 %v864, 7
        %v866 = vsub.s32 0, %v865
        %v867 = vrot.slane %v862, %v866
        %v869 = vmul.f32 %v849, %v867
        %v870 = vmul.f32 %v850, %v867
        %v871 = vmul.f32 %v851, %v867
        %v872 = vmul.f32 %v852, %v867
        %v873 = vmul.f32 %v853, %v867
        %v874 = vmul.f32 %v854, %v867
        %v875 = vmul.f32 %v855, %v867
        %v876 = vmul.f32 %v856, %v867
        %v877 = vmul.f32 %v857, %v867
        %v878 = vmul.f32 %v858, %v867
        %v879 = vmul.f32 %v859, %v867
        %v880 = vmul.f32 %v860, %v867
        %v881 = vmul.f32 %v861, %v867
        %v882 = vsel %vm484, %v869, 0.0
        %883 = vadd.xlane.f32.xlu0 %v882
        %v884 = vpop.xlane.xlu0 %883
        %v885 = vsel %vm484, %v870, 0.0
        %886 = vadd.xlane.f32.xlu0 %v885
        %v887 = vpop.xlane.xlu0 %886
        %v888 = vsel %vm484, %v871, 0.0
        %889 = vadd.xlane.f32.xlu0 %v888
        %v890 = vpop.xlane.xlu0 %889
        %v891 = vsel %vm484, %v872, 0.0
        %892 = vadd.xlane.f32.xlu0 %v891
        %v893 = vpop.xlane.xlu0 %892
        %v894 = vsel %vm484, %v873, 0.0
        %895 = vadd.xlane.f32.xlu0 %v894
        %v896 = vpop.xlane.xlu0 %895
        %v897 = vsel %vm484, %v874, 0.0
        %898 = vadd.xlane.f32.xlu0 %v897
        %v899 = vpop.xlane.xlu0 %898
        %v900 = vsel %vm484, %v875, 0.0
        %901 = vadd.xlane.f32.xlu0 %v900
        %v902 = vpop.xlane.xlu0 %901
        %v903 = vsel %vm484, %v876, 0.0
        %904 = vadd.xlane.f32.xlu0 %v903
        %v905 = vpop.xlane.xlu0 %904
        %v906 = vsel %vm484, %v877, 0.0
        %907 = vadd.xlane.f32.xlu0 %v906
        %v908 = vpop.xlane.xlu0 %907
        %v909 = vsel %vm484, %v878, 0.0
        %910 = vadd.xlane.f32.xlu0 %v909
        %v911 = vpop.xlane.xlu0 %910
        %v912 = vsel %vm484, %v879, 0.0
        %913 = vadd.xlane.f32.xlu0 %v912
        %v914 = vpop.xlane.xlu0 %913
        %v915 = vsel %vm484, %v880, 0.0
        %916 = vadd.xlane.f32.xlu0 %v915
        %v917 = vpop.xlane.xlu0 %916
        %v918 = vsel %vm484, %v881, 0.0
        %919 = vadd.xlane.f32.xlu0 %v918
        %v920 = vpop.xlane.xlu0 %919
        %v921 = vlaneseq
        %v922 = vshrl.u32 %v921, 7
        %v923 = vsub.s32 3, %v922
        %v924 = vrot.slane %v273, %v923
        %v925 = vadd.f32 %v884, %v924
        %v926 = vadd.f32 %v887, %v924
        %v927 = vadd.f32 %v890, %v924
        %v928 = vadd.f32 %v893, %v924
        %v929 = vadd.f32 %v896, %v924
        %v930 = vadd.f32 %v899, %v924
        %v931 = vadd.f32 %v902, %v924
        %v932 = vadd.f32 %v905, %v924
        %v933 = vadd.f32 %v908, %v924
        %v934 = vadd.f32 %v911, %v924
        %v935 = vadd.f32 %v914, %v924
        %v936 = vadd.f32 %v917, %v924
        %v937 = vadd.f32 %v920, %v924
        %v938 = vmul.f32 %v925, 0.5
        %v939 = vmul.f32 %v926, 0.5
        %v940 = vmul.f32 %v927, 0.5
        %v941 = vmul.f32 %v928, 0.5
        %v942 = vmul.f32 %v929, 0.5
        %v943 = vmul.f32 %v930, 0.5
        %v944 = vmul.f32 %v931, 0.5
        %v945 = vmul.f32 %v932, 0.5
        %v946 = vmul.f32 %v933, 0.5
        %v947 = vmul.f32 %v934, 0.5
        %v948 = vmul.f32 %v935, 0.5
        %v949 = vmul.f32 %v936, 0.5
        %v950 = vmul.f32 %v937, 0.5
        %v951 = vtanh.pop %v938
        %v952 = vtanh.pop %v939
        %v953 = vtanh.pop %v940
        %v954 = vtanh.pop %v941
        %v955 = vtanh.pop %v942
        %v956 = vtanh.pop %v943
        %v957 = vtanh.pop %v944
        %v958 = vtanh.pop %v945
        %v959 = vtanh.pop %v946
        %v960 = vtanh.pop %v947
        %v961 = vtanh.pop %v948
        %v962 = vtanh.pop %v949
        %v963 = vtanh.pop %v950
        %v964 = vmul.f32 %v951, 0.5
        %v965 = vmul.f32 %v952, 0.5
        %v966 = vmul.f32 %v953, 0.5
        %v967 = vmul.f32 %v954, 0.5
        %v968 = vmul.f32 %v955, 0.5
        %v969 = vmul.f32 %v956, 0.5
        %v970 = vmul.f32 %v957, 0.5
        %v971 = vmul.f32 %v958, 0.5
        %v972 = vmul.f32 %v959, 0.5
        %v973 = vmul.f32 %v960, 0.5
        %v974 = vmul.f32 %v961, 0.5
        %v975 = vmul.f32 %v962, 0.5
        %v976 = vmul.f32 %v963, 0.5
        %v977 = vadd.f32 %v964, 0.5
        %v978 = vadd.f32 %v965, 0.5
        %v979 = vadd.f32 %v966, 0.5
        %v980 = vadd.f32 %v967, 0.5
        %v981 = vadd.f32 %v968, 0.5
        %v982 = vadd.f32 %v969, 0.5
        %v983 = vadd.f32 %v970, 0.5
        %v984 = vadd.f32 %v971, 0.5
        %v985 = vadd.f32 %v972, 0.5
        %v986 = vadd.f32 %v973, 0.5
        %v987 = vadd.f32 %v974, 0.5
        %v988 = vadd.f32 %v975, 0.5
        %v989 = vadd.f32 %v976, 0.5
        %vm990 = vcmask 7168
        %991 = vst.msk [vmem:[%s253] sm:$0xff] %vm990, %v977
        %992 = vst.msk [vmem:[%s253 + $0x8] sm:$0xff] %vm990, %v978
        %993 = vst.msk [vmem:[%s253 + $0x10] sm:$0xff] %vm990, %v979
        %994 = vst.msk [vmem:[%s253 + $0x18] sm:$0xff] %vm990, %v980
        %995 = vst.msk [vmem:[%s253 + $0x20] sm:$0xff] %vm990, %v981
        %996 = vst.msk [vmem:[%s253 + $0x28] sm:$0xff] %vm990, %v982
        %997 = vst.msk [vmem:[%s253 + $0x30] sm:$0xff] %vm990, %v983
        %998 = vst.msk [vmem:[%s253 + $0x38] sm:$0xff] %vm990, %v984
        %999 = vst.msk [vmem:[%s253 + $0x40] sm:$0xff] %vm990, %v985
        %1000 = vst.msk [vmem:[%s253 + $0x48] sm:$0xff] %vm990, %v986
        %1001 = vst.msk [vmem:[%s253 + $0x50] sm:$0xff] %vm990, %v987
        %1002 = vst.msk [vmem:[%s253 + $0x58] sm:$0xff] %vm990, %v988
        %1003 = vst.msk [vmem:[%s253 + $0x60] sm:$0xff] %vm990, %v989
        %s1004 = sand.u32 %s156, 1
        %s1005 = sand.u32 %s156, 1
        %s1006 = smul.addr %s1005, 104
        %s1007 = scalar_lea.vmem [#allocation2], %s1006
        // Predicated region
        $region45: #{tpu_custom_call.1} parent=43 // pred_check
          %p1008 = pneg %p166
        $region46: #{tpu_custom_call.1} parent=43 // pred_check_branch
          %1010 = sbr.rel (%p1008) target = $region48
        $region47: #{tpu_custom_call.1} parent=43 // pred_region
          %s1011 = smul.u32 13, %s17
          %s1012 = ssub.s32 25, %s1011
          %p1013 = scmp.lt.s32.totalorder %s1012, 13
          %s1014 = scalar_select %p1013, %s1012, 13
          %s1015 = smul.u32 128, %s1014
          %p1016 = scmp.ne.s32.totalorder 0, %s1015
          %s1017 = smul.addr %s1011, 8
          %s1018 = scalar_lea.vmem %s6, %s1017
          // Predicated region
          $region49: #{tpu_custom_call.1} parent=47 // pred_check
            %p1019 = pneg %p1016
          $region50: #{tpu_custom_call.1} parent=47 // pred_check_branch
            %1021 = sbr.rel (%p1019) target = $region52
          $region51: #{tpu_custom_call.1} parent=47 // pred_region
            // Predicated region
            $region53: #{tpu_custom_call.1} parent=51 // pred_check
              _
            $region54: #{tpu_custom_call.1} parent=51 // pred_check_branch
              %1023 = sbr.rel (0) target = $region56
            $region55: #{tpu_custom_call.1} parent=51 // pred_region
              // Predicated region
              $region75: #{tpu_custom_call.1} parent=55 // pred_check
                _
              $region76: #{tpu_custom_call.1} parent=55 // pred_check_branch
                %1097 = sbr.rel (0) target = $region78
              $region77: #{tpu_custom_call.1} parent=55 // pred_region
                %s1098 = sdiv.u32.pop %s1014, 13
                %s1099 = srem.u32.pop %s1014, 13
                // While loop
                $region79: #{tpu_custom_call.1} parent=77 // loop_pre_header
                  _
                $region80: #{tpu_custom_call.1} parent=77 // loop_header
                  %s1101 = sphi 0, %s1103
                  %p1102 = scmp.ge.s32.totalorder %s1101, %s1098
                  %s1106 = sphi 0, %s1137
                  %s1107 = sphi %s1007, %s1140
                  %s1108 = sphi %s1018, %s1141
                $region81: #{tpu_custom_call.1} parent=77 // loop_header_branch
                  %1105 = sbr.rel (%p1102) target = $region85
                $region82: #{tpu_custom_call.1} parent=77 // loop_body
                  %v1109 = vld [vmem:[%s1107] sm:$0xff]
                  %1110 = vst [vmem:[%s1108] sm:$0xff] %v1109
                  %v1111 = vld [vmem:[%s1107 + $0x8] sm:$0xff]
                  %1112 = vst [vmem:[%s1108 + $0x8] sm:$0xff] %v1111
                  %v1113 = vld [vmem:[%s1107 + $0x10] sm:$0xff]
                  %1114 = vst [vmem:[%s1108 + $0x10] sm:$0xff] %v1113
                  %v1115 = vld [vmem:[%s1107 + $0x18] sm:$0xff]
                  %1116 = vst [vmem:[%s1108 + $0x18] sm:$0xff] %v1115
                  %v1117 = vld [vmem:[%s1107 + $0x20] sm:$0xff]
                  %1118 = vst [vmem:[%s1108 + $0x20] sm:$0xff] %v1117
                  %v1119 = vld [vmem:[%s1107 + $0x28] sm:$0xff]
                  %1120 = vst [vmem:[%s1108 + $0x28] sm:$0xff] %v1119
                  %v1121 = vld [vmem:[%s1107 + $0x30] sm:$0xff]
                  %1122 = vst [vmem:[%s1108 + $0x30] sm:$0xff] %v1121
                  %v1123 = vld [vmem:[%s1107 + $0x38] sm:$0xff]
                  %1124 = vst [vmem:[%s1108 + $0x38] sm:$0xff] %v1123
                  %v1125 = vld [vmem:[%s1107 + $0x40] sm:$0xff]
                  %1126 = vst [vmem:[%s1108 + $0x40] sm:$0xff] %v1125
                  %v1127 = vld [vmem:[%s1107 + $0x48] sm:$0xff]
                  %1128 = vst [vmem:[%s1108 + $0x48] sm:$0xff] %v1127
                  %v1129 = vld [vmem:[%s1107 + $0x50] sm:$0xff]
                  %1130 = vst [vmem:[%s1108 + $0x50] sm:$0xff] %v1129
                  %v1131 = vld [vmem:[%s1107 + $0x58] sm:$0xff]
                  %1132 = vst [vmem:[%s1108 + $0x58] sm:$0xff] %v1131
                  %v1133 = vld [vmem:[%s1107 + $0x60] sm:$0xff]
                  %1134 = vst [vmem:[%s1108 + $0x60] sm:$0xff] %v1133
                  %s1135 = sadd.s32 1, %s1106
                  %p1136 = scmp.ge.s32.totalorder %s1135, %s1098
                  %s1137 = scalar_select %p1136, 0, %s1135
                  %s1138 = smul.u32 %s1137, 104
                  %s1139 = smul.u32 %s1137, 104
                  %s1140 = scalar_lea.vmem %s1007, %s1138 [#allocation2]
                  %s1141 = scalar_lea.vmem %s1018, %s1139
                $region83: #{tpu_custom_call.1} parent=77 // loop_footer
                  %s1103 = sadd.s32 %s1101, 1
                $region84: #{tpu_custom_call.1} parent=77 // loop_footer_branch
                  %1100 = sbr.rel target = $region80
                $region85: #{tpu_custom_call.1} parent=77 // loop_exit
                  _
                %s1142 = sdiv.u32.pop %s1014, 13
                %s1143 = srem.u32.pop %s1014, 13
                %s1144 = smul.u32 %s1142, 13
                %s1145 = smul.u32 8, %s1144
                %s1146 = scalar_lea.vmem %s1007, %s1145 [#allocation2]
                %s1147 = smul.u32 8, %s1144
                %s1148 = scalar_lea.vmem %s1018, %s1147
                // While loop
                $region86: #{tpu_custom_call.1} parent=77 // loop_pre_header
                  _
                $region87: #{tpu_custom_call.1} parent=77 // loop_header
                  %s1150 = sphi 0, %s1152
                  %p1151 = scmp.ge.s32.totalorder %s1150, %s1143
                  %s1155 = sphi 0, %s1162
                  %s1156 = sphi %s1146, %s1165
                  %s1157 = sphi %s1148, %s1166
                $region88: #{tpu_custom_call.1} parent=77 // loop_header_branch
                  %1154 = sbr.rel (%p1151) target = $region92
                $region89: #{tpu_custom_call.1} parent=77 // loop_body
                  %v1158 = vld [vmem:[%s1156] sm:$0xff]
                  %1159 = vst [vmem:[%s1157] sm:$0xff] %v1158
                  %s1160 = sadd.s32 1, %s1155
                  %p1161 = scmp.ge.s32.totalorder %s1160, %s1143
                  %s1162 = scalar_select %p1161, 0, %s1160
                  %s1163 = smul.u32 %s1162, 8
                  %s1164 = smul.u32 %s1162, 8
                  %s1165 = scalar_lea.vmem %s1146, %s1163 [#allocation2]
                  %s1166 = scalar_lea.vmem %s1148, %s1164
                $region90: #{tpu_custom_call.1} parent=77 // loop_footer
                  %s1152 = sadd.s32 %s1150, 1
                $region91: #{tpu_custom_call.1} parent=77 // loop_footer_branch
                  %1149 = sbr.rel target = $region87
                $region92: #{tpu_custom_call.1} parent=77 // loop_exit
                  _
              $region78: #{tpu_custom_call.1} parent=55 // pred_fallthru
                _
              // Predicated region
              $region93: #{tpu_custom_call.1} parent=55 // pred_check
                _
              $region94: #{tpu_custom_call.1} parent=55 // pred_check_branch
                %1168 = sbr.rel target = $region96
              $region95: #{tpu_custom_call.1} parent=55 // pred_region
                _
              $region96: #{tpu_custom_call.1} parent=55 // pred_fallthru
                _
            $region56: #{tpu_custom_call.1} parent=51 // pred_fallthru
              _
            // Predicated region
            $region57: #{tpu_custom_call.1} parent=51 // pred_check
              _
            $region58: #{tpu_custom_call.1} parent=51 // pred_check_branch
              %1025 = sbr.rel target = $region60
            $region59: #{tpu_custom_call.1} parent=51 // pred_region
              %s1027 = sdiv.u32.pop %s1014, 13
              %s1028 = srem.u32.pop %s1014, 13
              // While loop
              $region61: #{tpu_custom_call.1} parent=59 // loop_pre_header
                _
              $region62: #{tpu_custom_call.1} parent=59 // loop_header
                %s1030 = sphi 0, %s1032
                %p1031 = scmp.ge.s32.totalorder %s1030, %s1027
                %s1035 = sphi 0, %s1066
                %s1036 = sphi %s1007, %s1069
                %s1037 = sphi %s1018, %s1070
              $region63: #{tpu_custom_call.1} parent=59 // loop_header_branch
                %1034 = sbr.rel (%p1031) target = $region67
              $region64: #{tpu_custom_call.1} parent=59 // loop_body
                %v1038 = vld [vmem:[%s1036] sm:$0xff]
                %1039 = vst [vmem:[%s1037] sm:$0xff] %v1038
                %v1040 = vld [vmem:[%s1036 + $0x8] sm:$0xff]
                %1041 = vst [vmem:[%s1037 + $0x8] sm:$0xff] %v1040
                %v1042 = vld [vmem:[%s1036 + $0x10] sm:$0xff]
                %1043 = vst [vmem:[%s1037 + $0x10] sm:$0xff] %v1042
                %v1044 = vld [vmem:[%s1036 + $0x18] sm:$0xff]
                %1045 = vst [vmem:[%s1037 + $0x18] sm:$0xff] %v1044
                %v1046 = vld [vmem:[%s1036 + $0x20] sm:$0xff]
                %1047 = vst [vmem:[%s1037 + $0x20] sm:$0xff] %v1046
                %v1048 = vld [vmem:[%s1036 + $0x28] sm:$0xff]
                %1049 = vst [vmem:[%s1037 + $0x28] sm:$0xff] %v1048
                %v1050 = vld [vmem:[%s1036 + $0x30] sm:$0xff]
                %1051 = vst [vmem:[%s1037 + $0x30] sm:$0xff] %v1050
                %v1052 = vld [vmem:[%s1036 + $0x38] sm:$0xff]
                %1053 = vst [vmem:[%s1037 + $0x38] sm:$0xff] %v1052
                %v1054 = vld [vmem:[%s1036 + $0x40] sm:$0xff]
                %1055 = vst [vmem:[%s1037 + $0x40] sm:$0xff] %v1054
                %v1056 = vld [vmem:[%s1036 + $0x48] sm:$0xff]
                %1057 = vst [vmem:[%s1037 + $0x48] sm:$0xff] %v1056
                %v1058 = vld [vmem:[%s1036 + $0x50] sm:$0xff]
                %1059 = vst [vmem:[%s1037 + $0x50] sm:$0xff] %v1058
                %v1060 = vld [vmem:[%s1036 + $0x58] sm:$0xff]
                %1061 = vst [vmem:[%s1037 + $0x58] sm:$0xff] %v1060
                %v1062 = vld [vmem:[%s1036 + $0x60] sm:$0xff]
                %1063 = vst [vmem:[%s1037 + $0x60] sm:$0xff] %v1062
                %s1064 = sadd.s32 1, %s1035
                %p1065 = scmp.ge.s32.totalorder %s1064, %s1027
                %s1066 = scalar_select %p1065, 0, %s1064
                %s1067 = smul.u32 %s1066, 104
                %s1068 = smul.u32 %s1066, 104
                %s1069 = scalar_lea.vmem %s1007, %s1067 [#allocation2]
                %s1070 = scalar_lea.vmem %s1018, %s1068
              $region65: #{tpu_custom_call.1} parent=59 // loop_footer
                %s1032 = sadd.s32 %s1030, 1
              $region66: #{tpu_custom_call.1} parent=59 // loop_footer_branch
                %1029 = sbr.rel target = $region62
              $region67: #{tpu_custom_call.1} parent=59 // loop_exit
                _
              %s1071 = sdiv.u32.pop %s1014, 13
              %s1072 = srem.u32.pop %s1014, 13
              %s1073 = smul.u32 %s1071, 13
              %s1074 = smul.u32 8, %s1073
              %s1075 = scalar_lea.vmem %s1007, %s1074 [#allocation2]
              %s1076 = smul.u32 8, %s1073
              %s1077 = scalar_lea.vmem %s1018, %s1076
              // While loop
              $region68: #{tpu_custom_call.1} parent=59 // loop_pre_header
                _
              $region69: #{tpu_custom_call.1} parent=59 // loop_header
                %s1079 = sphi 0, %s1081
                %p1080 = scmp.ge.s32.totalorder %s1079, %s1072
                %s1084 = sphi 0, %s1091
                %s1085 = sphi %s1075, %s1094
                %s1086 = sphi %s1077, %s1095
              $region70: #{tpu_custom_call.1} parent=59 // loop_header_branch
                %1083 = sbr.rel (%p1080) target = $region74
              $region71: #{tpu_custom_call.1} parent=59 // loop_body
                %v1087 = vld [vmem:[%s1085] sm:$0xff]
                %1088 = vst [vmem:[%s1086] sm:$0xff] %v1087
                %s1089 = sadd.s32 1, %s1084
                %p1090 = scmp.ge.s32.totalorder %s1089, %s1072
                %s1091 = scalar_select %p1090, 0, %s1089
                %s1092 = smul.u32 %s1091, 8
                %s1093 = smul.u32 %s1091, 8
                %s1094 = scalar_lea.vmem %s1075, %s1092 [#allocation2]
                %s1095 = scalar_lea.vmem %s1077, %s1093
              $region72: #{tpu_custom_call.1} parent=59 // loop_footer
                %s1081 = sadd.s32 %s1079, 1
              $region73: #{tpu_custom_call.1} parent=59 // loop_footer_branch
                %1078 = sbr.rel target = $region69
              $region74: #{tpu_custom_call.1} parent=59 // loop_exit
                _
            $region60: #{tpu_custom_call.1} parent=51 // pred_fallthru
              _
          $region52: #{tpu_custom_call.1} parent=47 // pred_fallthru
            _
          %1169 = vnop
        $region48: #{tpu_custom_call.1} parent=43 // pred_fallthru
          _
      $region44: #{tpu_custom_call.1} parent=5 // pred_fallthru
        _
      %p1170 = scmp.le.s32.totalorder 2, %s12
      // Predicated region
      $region97: #{tpu_custom_call.1} parent=5 // pred_check
        %p1171 = pneg %p1170
      $region98: #{tpu_custom_call.1} parent=5 // pred_check_branch
        %1173 = sbr.rel (%p1171) target = $region100
      $region99: #{tpu_custom_call.1} parent=5 // pred_region
        %s1174 = ssub.s32 %s12, 2
        // Predicated region
        $region101: #{tpu_custom_call.1} parent=99 // pred_check
          %p1175 = pneg %p172
        $region102: #{tpu_custom_call.1} parent=99 // pred_check_branch
          %1177 = sbr.rel (%p1175) target = $region104
        $region103: #{tpu_custom_call.1} parent=99 // pred_region
          %s1178 = sand.u32 %s157, 1
          %s1179 = sand.u32 %s157, 1
          %s1180 = smul.addr %s1179, 104
          %s1181 = scalar_lea.vmem [#allocation2], %s1180
        $region104: #{tpu_custom_call.1} parent=99 // pred_fallthru
          _
      $region100: #{tpu_custom_call.1} parent=5 // pred_fallthru
        _
    $region6: #{tpu_custom_call.1} parent=1 // loop_footer
      %s16 = sadd.s32 1, %s12
    $region7: #{tpu_custom_call.1} parent=1 // loop_footer_branch
      %11 = sbr.rel target = $region3
    $region8: #{tpu_custom_call.1} parent=1 // loop_exit
      _

</llo_original>
